<compile_context>
chip_gen: v7x
topology: tpu7x:2x2x1
jax: 0.10.0
libtpu: 0.0.40
codegen_flags: <defaults>
</compile_context>

<pallas_src>
import functools
import math

import numpy as np
import jax
import jax.numpy as jnp
from jax.experimental import pallas as pl
from jax.experimental.pallas import tpu as pltpu


# ---------------------------------------------------------------------------
# Init-time precompute (mirrors CaputoLoss.__init__)
# ---------------------------------------------------------------------------

def _deriv_matrix_np(N, dx):
    """torch.gradient-style derivative as a matrix: x_deriv = x @ D.T."""
    D = np.zeros((N, N), dtype=np.float64)
    inv2 = 0.5 / dx
    for n in range(1, N - 1):
        D[n, n - 1] = -inv2
        D[n, n + 1] = inv2
    D[0, 0], D[0, 1] = -1.0 / dx, 1.0 / dx
    D[N - 1, N - 2], D[N - 1, N - 1] = -1.0 / dx, 1.0 / dx
    return D


def _caputo_matrix_np(N, alpha, dx):
    """L1-scheme Caputo quadrature:  (r @ W)[n] = dx^(1-a)/Gamma(2-a) *
    sum_{k<n} r[k] ((n-k)^(1-a) - (n-k-1)^(1-a)).  W[k, n] != 0 only for n > k."""
    idx = np.arange(N)
    J = idx[None, :] - idx[:, None]              # n - k
    Jp = np.maximum(J, 1).astype(np.float64)
    Jm = np.maximum(J - 1, 0).astype(np.float64)
    coef = np.where(J >= 1, Jp ** (1.0 - alpha) - Jm ** (1.0 - alpha), 0.0)
    scale = dx ** (1.0 - alpha) / math.gamma(2.0 - alpha)
    return scale * coef


def caputo_loss_init(N, *, alpha, dx, matmul_dtype=jnp.bfloat16):
    """Fold the derivative into the quadrature:  M = D^T @ W, so that
    (data_deriv - g_deriv) @ W == (data - g) @ M.  bf16 storage by default
    (f32 MXU accumulation); the residual form has no cancellation."""
    D = _deriv_matrix_np(N, dx)
    W = _caputo_matrix_np(N, alpha, dx)
    M = D.T @ W
    # The tiled kernel only visits block pairs with k <= n (triangular grid);
    # that is exact only if M has no support below the diagonal.  True for the
    # +-1-point gradient stencil; guard against wider / backward stencils.
    assert np.max(np.abs(np.tril(M, -1))) < 1e-9, (
        "deriv stencil breaks the causal (k <= n) structure the kernel assumes")
    return jnp.asarray(M, dtype=matmul_dtype)


# ---------------------------------------------------------------------------
# Kernels
# ---------------------------------------------------------------------------

def _psum_8x128(x):
    """Reduce an (R, C) f32 tile (R % 8 == 0, C % 128 == 0) to a lane-aligned
    (8, 128) partial-sum block using only vreg-aligned static slices and VPU
    adds (no XLU cross-lane reduce).  Final reduce happens in XLA on the tiny
    (nb*8, 128) output."""
    R, C = x.shape
    rows = x[0:8, :]
    for r0 in range(8, R, 8):
        rows = rows + x[r0:r0 + 8, :]
    acc = rows[:, 0:128]
    for c0 in range(128, C, 128):
        acc = acc + rows[:, c0:c0 + 128]
    return acc


def _caputo_resident_kernel(r_ref, m_ref, out_ref, *, w0, w1):
    """Fast path: whole quadrature matrix M resident in VMEM, grid over B only.
    r_ref: (tb, N), m_ref: (N, N), out_ref: (8, 128) per-B-tile partial sums."""
    r = r_ref[...]
    cap = jnp.dot(r, m_ref[...], preferred_element_type=jnp.float32)
    r32 = r.astype(jnp.float32)
    out_ref[...] = w1 * _psum_8x128(cap * cap) + w0 * _psum_8x128(r32 * r32)


def _caputo_tiled_kernel(jt_ref, kt_ref, r_ref, m_ref, out_ref, acc_ref, *, w0, w1):
    """Tiled path over a flattened triangular (k outer, j inner, j >= k) grid.

    r_ref:   (tb, tn)      residual block (i, k)   -- k changes only at outer steps
    m_ref:   (tn, tn)      quadrature block (k, j)
    out_ref: (8, 128)      lane-aligned per-B-tile loss partial sums
    acc_ref: (nn, tb, tn)  f32 accumulator bank, one slot per output column j
    """
    t = pl.program_id(1)
    j = jt_ref[t]
    k = kt_ref[t]

    @pl.when(t == 0)
    def _():
        out_ref[...] = jnp.zeros_like(out_ref)

    contrib = jnp.dot(r_ref[...], m_ref[...], preferred_element_type=jnp.float32)

    @pl.when(k == 0)
    def _():
        acc_ref[j] = contrib

    @pl.when(k != 0)
    def _():
        acc_ref[j] = acc_ref[j] + contrib

    # Diagonal step (j == k): the r block (i, k) is fresh (counted exactly once
    # for the MSE term) and output column j just received its final (k == j)
    # contribution, so the Caputo term for that column can be folded in.
    @pl.when(j == k)
    def _():
        r32 = r_ref[...].astype(jnp.float32)
        cap = acc_ref[j]
        out_ref[...] = (out_ref[...]
                        + w0 * _psum_8x128(r32 * r32)
                        + w1 * _psum_8x128(cap * cap))


# ---------------------------------------------------------------------------
# Wrapper
# ---------------------------------------------------------------------------

def _vmem_budget_bytes():
    """Scoped-VMEM budget: ~48 MiB on v7x (64 MiB physical per TensorCore),
    ~100 MiB on v5e / v6e (128 MiB physical)."""
    try:
        phys = int(pltpu.get_tpu_info().vmem_capacity_bytes)
    except Exception:
        phys = 64 * 2 ** 20          # conservative (v7x-sized) fallback
    return int(max(32 * 2 ** 20, min(phys - 16 * 2 ** 20, 100 * 2 ** 20)))


def _pick_tb(B, itemsize, requested=None):
    if requested is not None:
        assert B % requested == 0, "block_b must divide the (padded) batch*channel dim"
        return requested
    min_mult = 8 if itemsize >= 4 else (16 if itemsize == 2 else 32)
    cands = [c for c in (512, 256, 128, 64, 32, 16, 8)
             if c <= B and B % c == 0 and c % min_mult == 0]
    if not cands:
        return B                     # full-dim block is always legal
    for c in cands:                  # prefer nb >= 2 (keeps both v7x TCs busy)
        if B // c >= 2:
            return c
    return cands[-1]


def _pick_tn(N, requested=None):
    if requested is not None:
        assert N % requested == 0 and requested % 128 == 0
        return requested
    for c in (1024, 512, 256, 128):
        if c <= N and N % c == 0:
            return c
    return N


def caputo_loss_pallas(g, data, m, *, w0, w1, block_b=None, block_n=None,
                       force_tiled=False):
    """g, data: (B, N);  m = D^T @ W: (N, N) f32/bf16.  Returns the scalar loss."""
    B0, N = g.shape
    assert data.shape == (B0, N) and m.shape == (N, N)
    # TODO(synk): N must be a multiple of 128; zero-pad the time axis (and M)
    #             upstream for other lengths.
    assert N % 128 == 0

    # Residual refactor: a single activation stream, cast once in the wrapper.
    r = (data.astype(jnp.float32) - g.astype(jnp.float32)).astype(m.dtype)
    B = ((B0 + 7) // 8) * 8
    if B != B0:                       # zero rows contribute 0 to both terms
        r = jnp.pad(r, ((0, B - B0), (0, 0)))

    r_bytes = r.dtype.itemsize
    m_bytes = m.dtype.itemsize
    budget = _vmem_budget_bytes()
    tb = _pick_tb(B, r_bytes, block_b)

    def resident_footprint(tb_):
        return (2 * tb_ * N * r_bytes          # double-buffered r panel
                + 2 * N * N * m_bytes          # M (constant-index block, 2 bufs)
                + tb_ * N * 4                  # f32 matmul result
                + 2 * 8 * 128 * 4 + (1 << 20))

    use_resident = not force_tiled
    if use_resident and block_b is None:
        while tb > 8 and resident_footprint(tb) > budget and B % (tb // 2) == 0:
            tb //= 2
    use_resident = use_resident and resident_footprint(tb) <= budget

    if use_resident:
        # ------------------- resident-M fast path ------------------------
        nb = B // tb
        kernel = functools.partial(_caputo_resident_kernel,
                                   w0=float(w0), w1=float(w1))
        out = pl.pallas_call(
            kernel,
            out_shape=jax.ShapeDtypeStruct((nb * 8, 128), jnp.float32),
            grid_spec=pltpu.PrefetchScalarGridSpec(
                num_scalar_prefetch=0,
                grid=(nb,),
                in_specs=[pl.BlockSpec((tb, N), lambda i: (i, 0)),
                          pl.BlockSpec((N, N), lambda i: (0, 0))],
                out_specs=pl.BlockSpec((8, 128), lambda i: (i, 0))),
            compiler_params=pltpu.CompilerParams(
                dimension_semantics=("parallel",),
                vmem_limit_bytes=budget),
            cost_estimate=pl.CostEstimate(
                flops=int(2 * B * N * N + 4 * B * N),
                transcendentals=0,
                bytes_accessed=int(B * N * r_bytes + N * N * m_bytes
                                   + nb * 8 * 128 * 4)),
        )(r, m)
    else:
        # ------------------- tiled triangular-grid path ------------------
        tn = _pick_tn(N, block_n)
        nn = N // tn

        def tiled_footprint(tb_):
            return (2 * tb_ * tn * r_bytes + 2 * tn * tn * m_bytes
                    + nn * tb_ * tn * 4 + 2 * 8 * 128 * 4 + (1 << 20))

        if block_b is None:
            while tb > 8 and tiled_footprint(tb) > budget and B % (tb // 2) == 0:
                tb //= 2
        nb = B // tb

        # Flattened triangular grid: k outer, j inner (j >= k).  r's block index
        # depends only on k, so r is DMA'd exactly once per B-tile, and the
        # provably-zero k > j half of the (j, k) rectangle never becomes a step.
        jt, kt = [], []
        for k in range(nn):
            for j in range(k, nn):
                jt.append(j)
                kt.append(k)
        T = len(jt)
        jt = jnp.asarray(jt, dtype=jnp.int32)
        kt = jnp.asarray(kt, dtype=jnp.int32)

        kernel = functools.partial(_caputo_tiled_kernel,
                                   w0=float(w0), w1=float(w1))
        out = pl.pallas_call(
            kernel,
            out_shape=jax.ShapeDtypeStruct((nb * 8, 128), jnp.float32),
            grid_spec=pltpu.PrefetchScalarGridSpec(
                num_scalar_prefetch=2,
                grid=(nb, T),
                in_specs=[pl.BlockSpec((tb, tn),
                                       lambda i, t, jt_s, kt_s: (i, kt_s[t])),
                          pl.BlockSpec((tn, tn),
                                       lambda i, t, jt_s, kt_s: (kt_s[t], jt_s[t]))],
                out_specs=pl.BlockSpec((8, 128),
                                       lambda i, t, jt_s, kt_s: (i, 0)),
                scratch_shapes=[pltpu.VMEM((nn, tb, tn), jnp.float32)]),
            compiler_params=pltpu.CompilerParams(
                dimension_semantics=("parallel", "arbitrary"),
                vmem_limit_bytes=budget),
            cost_estimate=pl.CostEstimate(
                flops=int(2 * nb * T * tb * tn * tn + 4 * B * N),
                transcendentals=0,
                bytes_accessed=int(B * N * r_bytes + nb * T * tn * tn * m_bytes
                                   + nb * 8 * 128 * 4)),
        )(jt, kt, r, m)

    # Each (8, 128) block holds lane-aligned partial sums of
    # w0*r^2 + w1*(r @ M)^2 over its B-tile; both module terms are means over
    # the original B0*N elements (padded rows are exactly zero).
    return jnp.sum(out) / (B0 * N)


# ---------------------------------------------------------------------------
# Pure-numpy float64 reference (mirrors the torch module)
# ---------------------------------------------------------------------------

def caputo_loss_ref_f64(g, data, *, alpha, dx, w0, w1):
    g64 = np.asarray(g, dtype=np.float64)
    d64 = np.asarray(data, dtype=np.float64)
    N = g64.shape[-1]
    D = _deriv_matrix_np(N, dx)
    W = _caputo_matrix_np(N, alpha, dx)
    mse = np.mean((g64 - d64) ** 2)
    r = (d64 - g64) @ D.T                       # data_deriv - g_deriv
    cap = np.mean((r @ W) ** 2)
    return w0 * mse + w1 * cap


if __name__ == "__main__":
    # small problem: batch=4, channels=4, seq=512  ->  B=16 rows, N=512 lanes
    batch, chan, N = 4, 4, 512
    B = batch * chan
    dx = 0.01
    alpha = 0.5            # deterministic alpha_callback stand-in
    w0, w1 = 1.0, 0.1      # deterministic weights_callback stand-in

    key = jax.random.PRNGKey(0)
    k1, k2 = jax.random.split(key)
    data = jax.random.normal(k1, (batch, chan, N), dtype=jnp.float32)
    g = data + 0.1 * jax.random.normal(k2, (batch, chan, N), dtype=jnp.float32)

    data2d = data.reshape(B, N)
    g2d = g.reshape(B, N)

    ref = float(caputo_loss_ref_f64(g2d, data2d, alpha=alpha, dx=dx, w0=w0, w1=w1))

    # __init__-time precompute (derivative folded into the quadrature).
    m_bf16 = caputo_loss_init(N, alpha=alpha, dx=dx)                          # default bf16
    m_f32 = caputo_loss_init(N, alpha=alpha, dx=dx, matmul_dtype=jnp.float32)

    # 1) default path: bf16 operands, VMEM-resident M, grid over B only.
    loss_bf16 = float(jax.block_until_ready(
        caputo_loss_pallas(g2d, data2d, m_bf16, w0=w0, w1=w1)))
    np.testing.assert_allclose(loss_bf16, ref, rtol=2.5e-2)

    # 2) f32 operands, resident-M path (tolerance allows for the MXU's
    #    bf16-pass handling of f32 operands at default precision).
    loss_f32 = float(jax.block_until_ready(
        caputo_loss_pallas(g2d, data2d, m_f32, w0=w0, w1=w1)))
    np.testing.assert_allclose(loss_f32, ref, rtol=1e-2)

    # 3) forced tiled path, small tiles: exercises B tiling, the scalar-prefetched
    #    triangular (j, k) tables and the per-column accumulator bank.
    loss_tiled = float(jax.block_until_ready(
        caputo_loss_pallas(g2d, data2d, m_f32, w0=w0, w1=w1,
                           force_tiled=True, block_b=8, block_n=128)))
    np.testing.assert_allclose(loss_tiled, ref, rtol=1e-2)
    np.testing.assert_allclose(loss_tiled, loss_f32, rtol=1e-3)

    # 4) tiled path with bf16 operands (tb auto-picked as a 16-multiple).
    loss_tiled_bf16 = float(jax.block_until_ready(
        caputo_loss_pallas(g2d, data2d, m_bf16, w0=w0, w1=w1,
                           force_tiled=True, block_n=256)))
    np.testing.assert_allclose(loss_tiled_bf16, ref, rtol=2.5e-2)

    assert all(np.isfinite(v) for v in (loss_bf16, loss_f32, loss_tiled, loss_tiled_bf16))
    print("KERNEL_OK")
</pallas_src>

<mosaic_0001>
module attributes {stable_mosaic.version = 11 : i64} {
  func.func @_caputo_resident_kernel(%arg0: i32, %arg1: memref<16x512xbf16, #tpu.memory_space<vmem>>, %arg2: memref<512x512xbf16, #tpu.memory_space<vmem>>, %arg3: memref<8x128xf32, #tpu.memory_space<vmem>>) attributes {dimension_semantics = [#tpu.dimension_semantics<parallel>], iteration_bounds = array<i64: 1>, scalar_prefetch = 0 : i64, scratch_operands = 0 : i64, tpu.core_type = #tpu.core_type<tc>, window_params = [{transform_indices = @transform_0, window_bounds = array<i64: 16, 512>}, {pipeline_mode = #tpu.pipeline_mode<synchronous>, transform_indices = @transform_1, window_bounds = array<i64: 512, 512>}, {transform_indices = @transform_2, window_bounds = array<i64: 8, 128>}]} {
    %c0 = arith.constant 0 : index
    %c0_0 = arith.constant 0 : index
    %0 = vector.load %arg1[%c0, %c0_0] : memref<16x512xbf16, #tpu.memory_space<vmem>>, vector<16x512xbf16>
    %c0_1 = arith.constant 0 : index
    %c0_2 = arith.constant 0 : index
    %1 = vector.load %arg2[%c0_1, %c0_2] : memref<512x512xbf16, #tpu.memory_space<vmem>>, vector<512x512xbf16>
    %cst = arith.constant dense<0.000000e+00> : vector<16x512xf32>
    %2 = tpu.matmul %0, %1, %cst {dimension_numbers = #tpu.dot_dimension_numbers<[1], [0], [0], [1], [0, 0, 1, 1], [], []>} : vector<16x512xbf16>, vector<512x512xbf16>, vector<16x512xf32> -> vector<16x512xf32>
    %3 = arith.extf %0 : vector<16x512xbf16> to vector<16x512xf32>
    %4 = arith.mulf %2, %2 : vector<16x512xf32>
    %5 = vector.extract_strided_slice %4 {offsets = [0, 0], sizes = [8, 512], strides = [1, 1]} : vector<16x512xf32> to vector<8x512xf32>
    %6 = vector.extract_strided_slice %4 {offsets = [8, 0], sizes = [8, 512], strides = [1, 1]} : vector<16x512xf32> to vector<8x512xf32>
    %7 = arith.addf %5, %6 : vector<8x512xf32>
    %8 = vector.extract_strided_slice %7 {offsets = [0, 0], sizes = [8, 128], strides = [1, 1]} : vector<8x512xf32> to vector<8x128xf32>
    %9 = vector.extract_strided_slice %7 {offsets = [0, 128], sizes = [8, 128], strides = [1, 1]} : vector<8x512xf32> to vector<8x128xf32>
    %10 = arith.addf %8, %9 : vector<8x128xf32>
    %11 = vector.extract_strided_slice %7 {offsets = [0, 256], sizes = [8, 128], strides = [1, 1]} : vector<8x512xf32> to vector<8x128xf32>
    %12 = arith.addf %10, %11 : vector<8x128xf32>
    %13 = vector.extract_strided_slice %7 {offsets = [0, 384], sizes = [8, 128], strides = [1, 1]} : vector<8x512xf32> to vector<8x128xf32>
    %14 = arith.addf %12, %13 : vector<8x128xf32>
    %cst_3 = arith.constant 1.000000e-01 : f32
    %15 = vector.broadcast %cst_3 : f32 to vector<8x128xf32>
    %16 = arith.mulf %15, %14 : vector<8x128xf32>
    %17 = arith.mulf %3, %3 : vector<16x512xf32>
    %18 = vector.extract_strided_slice %17 {offsets = [0, 0], sizes = [8, 512], strides = [1, 1]} : vector<16x512xf32> to vector<8x512xf32>
    %19 = vector.extract_strided_slice %17 {offsets = [8, 0], sizes = [8, 512], strides = [1, 1]} : vector<16x512xf32> to vector<8x512xf32>
    %20 = arith.addf %18, %19 : vector<8x512xf32>
    %21 = vector.extract_strided_slice %20 {offsets = [0, 0], sizes = [8, 128], strides = [1, 1]} : vector<8x512xf32> to vector<8x128xf32>
    %22 = vector.extract_strided_slice %20 {offsets = [0, 128], sizes = [8, 128], strides = [1, 1]} : vector<8x512xf32> to vector<8x128xf32>
    %23 = arith.addf %21, %22 : vector<8x128xf32>
    %24 = vector.extract_strided_slice %20 {offsets = [0, 256], sizes = [8, 128], strides = [1, 1]} : vector<8x512xf32> to vector<8x128xf32>
    %25 = arith.addf %23, %24 : vector<8x128xf32>
    %26 = vector.extract_strided_slice %20 {offsets = [0, 384], sizes = [8, 128], strides = [1, 1]} : vector<8x512xf32> to vector<8x128xf32>
    %27 = arith.addf %25, %26 : vector<8x128xf32>
    %cst_4 = arith.constant 1.000000e+00 : f32
    %28 = vector.broadcast %cst_4 : f32 to vector<8x128xf32>
    %29 = arith.mulf %28, %27 : vector<8x128xf32>
    %30 = arith.addf %16, %29 : vector<8x128xf32>
    %c0_5 = arith.constant 0 : index
    %c0_6 = arith.constant 0 : index
    %31 = vector.load %arg3[%c0_5, %c0_6] : memref<8x128xf32, #tpu.memory_space<vmem>>, vector<8x128xf32>
    tpu.vector_store %arg3[%c0_5, %c0_6], %30 {strides = array<i32>} : memref<8x128xf32, #tpu.memory_space<vmem>>, vector<8x128xf32>,
    return
  }
  func.func @transform_0(%arg0: i32) -> (i32, i32) {
    %c0_i32 = arith.constant 0 : i32
    %c0_i32_0 = arith.constant 0 : i32
    return %arg0, %c0_i32 : i32, i32
  }
  func.func @transform_1(%arg0: i32) -> (i32, i32) {
    %c0_i32 = arith.constant 0 : i32
    %c0_i32_0 = arith.constant 0 : i32
    %c0_i32_1 = arith.constant 0 : i32
    return %c0_i32, %c0_i32_0 : i32, i32
  }
  func.func @transform_2(%arg0: i32) -> (i32, i32) {
    %c0_i32 = arith.constant 0 : i32
    %c0_i32_0 = arith.constant 0 : i32
    return %arg0, %c0_i32 : i32, i32
  }
}

</mosaic_0001>

<llo_original>
// kernel: tpu_custom_call.1
$region0: #{tpu_custom_call.1}
  #allocation0 [shape = 'u32[]', space=smem, size = 0x4, offset = 0x4, fixed_abs, tag = 'smem constant byte address 0x4 - core index']
  #allocation1 [shape = 'u32[144,128]{1,0:T(1,128)}', space=vmem, size = 0x12000, scoped, tag = 'internal scratch']
  %s0 = inlined_call_operand.hbm [shape: bf16[16,512], index: 0, kind: input, shape index: {}]
  %s1 = inlined_call_operand.hbm [shape: bf16[512,512], index: 1, kind: input, shape index: {}]
  %s2 = inlined_call_operand.hbm [shape: f32[8,128], index: 2, kind: output, shape index: {}]
  %s3 = sld [smem:[#allocation0]]
  $region26: #{tpu_custom_call.1} parent=0
    _
  %s5 = ssub.s32 1, %s3
  %s6 = scalar_select 0, %s5, %s3
  $region1: #{tpu_custom_call.1} parent=0
    #allocation2 [shape = 'u8[16384]{0}', space=vmem, size = 0x4000, scoped, tag = 'input window, operand 0, single buffered']
    #allocation3 [shape = 's32[1]{0}', space=sflag, size = 0x4, scoped, tag = 'scoped memory for tpu_custom_call.1']
    #allocation4 [shape = 's32[1]{0}', space=sflag, size = 0x4, scoped, tag = 'scoped memory for tpu_custom_call.1']
    #allocation5 [shape = 'u8[524288]{0}', space=vmem, size = 0x80000, scoped, tag = 'input window, operand 1, single buffered']
    #allocation6 [shape = 's32[1]{0}', space=sflag, size = 0x4, scoped, tag = 'scoped memory for tpu_custom_call.1']
    #allocation7 [shape = 'u8[4096]{0}', space=vmem, size = 0x1000, scoped, tag = 'output window, operand 0, single buffered']
    %7 = vsyncpa [#allocation3], 0
    %8 = vsyncpa [#allocation6], 0
    %9 = vsyncpa [#allocation4], 0
    // Predicated region
    $region2: #{tpu_custom_call.1} parent=1 // pred_check
      _
    $region3: #{tpu_custom_call.1} parent=1 // pred_check_branch
      %11 = sbr.rel (0) target = $region5
    $region4: #{tpu_custom_call.1} parent=1 // pred_region
      %s13 = ssub.s32 512, 512
      %14 = vsyncadd [#allocation3], %s13
      %s15 = sshll.u32 [#allocation2], 4
      %s16 = int_to_ptr.vmem [resolvable:$true] %s15
      %21 = dma.hbm_to_vmem [thread:$0]  %s0, 512, %s16, [#allocation3], 256, 256, 16
    $region5: #{tpu_custom_call.1} parent=1 // pred_fallthru
      _
    // Predicated region
    $region6: #{tpu_custom_call.1} parent=1 // pred_check
      _
    $region7: #{tpu_custom_call.1} parent=1 // pred_check_branch
      %23 = sbr.rel (0) target = $region9
    $region8: #{tpu_custom_call.1} parent=1 // pred_region
      %s25 = ssub.s32 16384, 16384
      %26 = vsyncadd [#allocation6], %s25
      %s27 = sshll.u32 [#allocation5], 4
      %s28 = int_to_ptr.vmem [resolvable:$true] %s27
      %33 = dma.hbm_to_vmem [thread:$0]  %s1, 16384, %s28, [#allocation6], 256, 256, 16
    $region9: #{tpu_custom_call.1} parent=1 // pred_fallthru
      _
    // Predicated region
    $region10: #{tpu_custom_call.1} parent=1 // pred_check
      _
    $region11: #{tpu_custom_call.1} parent=1 // pred_check_branch
      %35 = sbr.rel (0) target = $region13
    $region12: #{tpu_custom_call.1} parent=1 // pred_region
      %36 = dma.done [#allocation3], 512
    $region13: #{tpu_custom_call.1} parent=1 // pred_fallthru
      _
    // Predicated region
    $region14: #{tpu_custom_call.1} parent=1 // pred_check
      _
    $region15: #{tpu_custom_call.1} parent=1 // pred_check_branch
      %38 = sbr.rel (0) target = $region17
    $region16: #{tpu_custom_call.1} parent=1 // pred_region
      %39 = dma.done [#allocation6], 16384
    $region17: #{tpu_custom_call.1} parent=1 // pred_fallthru
      _
    %v40 = vld [vmem:[#allocation2] sm:$0xff]
    %v41 = vld [vmem:[#allocation2 + $0x8] sm:$0xff]
    %v42 = vld [vmem:[#allocation2 + $0x10] sm:$0xff]
    %v43 = vld [vmem:[#allocation2 + $0x18] sm:$0xff]
    %v44 = vld [vmem:[#allocation5] sm:$0xff]
    %v45 = vld [vmem:[#allocation5 + $0x8] sm:$0xff]
    %v46 = vld [vmem:[#allocation5 + $0x10] sm:$0xff]
    %v47 = vld [vmem:[#allocation5 + $0x18] sm:$0xff]
    %v48 = vld [vmem:[#allocation5 + $0x20] sm:$0xff]
    %v49 = vld [vmem:[#allocation5 + $0x28] sm:$0xff]
    %v50 = vld [vmem:[#allocation5 + $0x30] sm:$0xff]
    %v51 = vld [vmem:[#allocation5 + $0x38] sm:$0xff]
    %v52 = vld [vmem:[#allocation5 + $0x40] sm:$0xff]
    %v53 = vld [vmem:[#allocation5 + $0x48] sm:$0xff]
    %v54 = vld [vmem:[#allocation5 + $0x50] sm:$0xff]
    %v55 = vld [vmem:[#allocation5 + $0x58] sm:$0xff]
    %v56 = vld [vmem:[#allocation5 + $0x60] sm:$0xff]
    %v57 = vld [vmem:[#allocation5 + $0x68] sm:$0xff]
    %v58 = vld [vmem:[#allocation5 + $0x70] sm:$0xff]
    %v59 = vld [vmem:[#allocation5 + $0x78] sm:$0xff]
    %v60 = vld [vmem:[#allocation5 + $0x80] sm:$0xff]
    %v61 = vld [vmem:[#allocation5 + $0x88] sm:$0xff]
    %v62 = vld [vmem:[#allocation5 + $0x90] sm:$0xff]
    %v63 = vld [vmem:[#allocation5 + $0x98] sm:$0xff]
    %v64 = vld [vmem:[#allocation5 + $0xa0] sm:$0xff]
    %v65 = vld [vmem:[#allocation5 + $0xa8] sm:$0xff]
    %v66 = vld [vmem:[#allocation5 + $0xb0] sm:$0xff]
    %v67 = vld [vmem:[#allocation5 + $0xb8] sm:$0xff]
    %v68 = vld [vmem:[#allocation5 + $0xc0] sm:$0xff]
    %v69 = vld [vmem:[#allocation5 + $0xc8] sm:$0xff]
    %v70 = vld [vmem:[#allocation5 + $0xd0] sm:$0xff]
    %v71 = vld [vmem:[#allocation5 + $0xd8] sm:$0xff]
    %v72 = vld [vmem:[#allocation5 + $0xe0] sm:$0xff]
    %v73 = vld [vmem:[#allocation5 + $0xe8] sm:$0xff]
    %v74 = vld [vmem:[#allocation5 + $0xf0] sm:$0xff]
    %v75 = vld [vmem:[#allocation5 + $0xf8] sm:$0xff]
    %v76 = vld [vmem:[#allocation5 + $0x100] sm:$0xff]
    %v77 = vld [vmem:[#allocation5 + $0x108] sm:$0xff]
    %v78 = vld [vmem:[#allocation5 + $0x110] sm:$0xff]
    %v79 = vld [vmem:[#allocation5 + $0x118] sm:$0xff]
    %v80 = vld [vmem:[#allocation5 + $0x120] sm:$0xff]
    %v81 = vld [vmem:[#allocation5 + $0x128] sm:$0xff]
    %v82 = vld [vmem:[#allocation5 + $0x130] sm:$0xff]
    %v83 = vld [vmem:[#allocation5 + $0x138] sm:$0xff]
    %v84 = vld [vmem:[#allocation5 + $0x140] sm:$0xff]
    %v85 = vld [vmem:[#allocation5 + $0x148] sm:$0xff]
    %v86 = vld [vmem:[#allocation5 + $0x150] sm:$0xff]
    %v87 = vld [vmem:[#allocation5 + $0x158] sm:$0xff]
    %v88 = vld [vmem:[#allocation5 + $0x160] sm:$0xff]
    %v89 = vld [vmem:[#allocation5 + $0x168] sm:$0xff]
    %v90 = vld [vmem:[#allocation5 + $0x170] sm:$0xff]
    %v91 = vld [vmem:[#allocation5 + $0x178] sm:$0xff]
    %v92 = vld [vmem:[#allocation5 + $0x180] sm:$0xff]
    %v93 = vld [vmem:[#allocation5 + $0x188] sm:$0xff]
    %v94 = vld [vmem:[#allocation5 + $0x190] sm:$0xff]
    %v95 = vld [vmem:[#allocation5 + $0x198] sm:$0xff]
    %v96 = vld [vmem:[#allocation5 + $0x1a0] sm:$0xff]
    %v97 = vld [vmem:[#allocation5 + $0x1a8] sm:$0xff]
    %v98 = vld [vmem:[#allocation5 + $0x1b0] sm:$0xff]
    %v99 = vld [vmem:[#allocation5 + $0x1b8] sm:$0xff]
    %v100 = vld [vmem:[#allocation5 + $0x1c0] sm:$0xff]
    %v101 = vld [vmem:[#allocation5 + $0x1c8] sm:$0xff]
    %v102 = vld [vmem:[#allocation5 + $0x1d0] sm:$0xff]
    %v103 = vld [vmem:[#allocation5 + $0x1d8] sm:$0xff]
    %v104 = vld [vmem:[#allocation5 + $0x1e0] sm:$0xff]
    %v105 = vld [vmem:[#allocation5 + $0x1e8] sm:$0xff]
    %v106 = vld [vmem:[#allocation5 + $0x1f0] sm:$0xff]
    %v107 = vld [vmem:[#allocation5 + $0x1f8] sm:$0xff]
    %v108 = vld [vmem:[#allocation5 + $0x200] sm:$0xff]
    %v109 = vld [vmem:[#allocation5 + $0x208] sm:$0xff]
    %v110 = vld [vmem:[#allocation5 + $0x210] sm:$0xff]
    %v111 = vld [vmem:[#allocation5 + $0x218] sm:$0xff]
    %v112 = vld [vmem:[#allocation5 + $0x220] sm:$0xff]
    %v113 = vld [vmem:[#allocation5 + $0x228] sm:$0xff]
    %v114 = vld [vmem:[#allocation5 + $0x230] sm:$0xff]
    %v115 = vld [vmem:[#allocation5 + $0x238] sm:$0xff]
    %v116 = vld [vmem:[#allocation5 + $0x240] sm:$0xff]
    %v117 = vld [vmem:[#allocation5 + $0x248] sm:$0xff]
    %v118 = vld [vmem:[#allocation5 + $0x250] sm:$0xff]
    %v119 = vld [vmem:[#allocation5 + $0x258] sm:$0xff]
    %v120 = vld [vmem:[#allocation5 + $0x260] sm:$0xff]
    %v121 = vld [vmem:[#allocation5 + $0x268] sm:$0xff]
    %v122 = vld [vmem:[#allocation5 + $0x270] sm:$0xff]
    %v123 = vld [vmem:[#allocation5 + $0x278] sm:$0xff]
    %v124 = vld [vmem:[#allocation5 + $0x280] sm:$0xff]
    %v125 = vld [vmem:[#allocation5 + $0x288] sm:$0xff]
    %v126 = vld [vmem:[#allocation5 + $0x290] sm:$0xff]
    %v127 = vld [vmem:[#allocation5 + $0x298] sm:$0xff]
    %v128 = vld [vmem:[#allocation5 + $0x2a0] sm:$0xff]
    %v129 = vld [vmem:[#allocation5 + $0x2a8] sm:$0xff]
    %v130 = vld [vmem:[#allocation5 + $0x2b0] sm:$0xff]
    %v131 = vld [vmem:[#allocation5 + $0x2b8] sm:$0xff]
    %v132 = vld [vmem:[#allocation5 + $0x2c0] sm:$0xff]
    %v133 = vld [vmem:[#allocation5 + $0x2c8] sm:$0xff]
    %v134 = vld [vmem:[#allocation5 + $0x2d0] sm:$0xff]
    %v135 = vld [vmem:[#allocation5 + $0x2d8] sm:$0xff]
    %v136 = vld [vmem:[#allocation5 + $0x2e0] sm:$0xff]
    %v137 = vld [vmem:[#allocation5 + $0x2e8] sm:$0xff]
    %v138 = vld [vmem:[#allocation5 + $0x2f0] sm:$0xff]
    %v139 = vld [vmem:[#allocation5 + $0x2f8] sm:$0xff]
    %v140 = vld [vmem:[#allocation5 + $0x300] sm:$0xff]
    %v141 = vld [vmem:[#allocation5 + $0x308] sm:$0xff]
    %v142 = vld [vmem:[#allocation5 + $0x310] sm:$0xff]
    %v143 = vld [vmem:[#allocation5 + $0x318] sm:$0xff]
    %v144 = vld [vmem:[#allocation5 + $0x320] sm:$0xff]
    %v145 = vld [vmem:[#allocation5 + $0x328] sm:$0xff]
    %v146 = vld [vmem:[#allocation5 + $0x330] sm:$0xff]
    %v147 = vld [vmem:[#allocation5 + $0x338] sm:$0xff]
    %v148 = vld [vmem:[#allocation5 + $0x340] sm:$0xff]
    %v149 = vld [vmem:[#allocation5 + $0x348] sm:$0xff]
    %v150 = vld [vmem:[#allocation5 + $0x350] sm:$0xff]
    %v151 = vld [vmem:[#allocation5 + $0x358] sm:$0xff]
    %v152 = vld [vmem:[#allocation5 + $0x360] sm:$0xff]
    %v153 = vld [vmem:[#allocation5 + $0x368] sm:$0xff]
    %v154 = vld [vmem:[#allocation5 + $0x370] sm:$0xff]
    %v155 = vld [vmem:[#allocation5 + $0x378] sm:$0xff]
    %v156 = vld [vmem:[#allocation5 + $0x380] sm:$0xff]
    %v157 = vld [vmem:[#allocation5 + $0x388] sm:$0xff]
    %v158 = vld [vmem:[#allocation5 + $0x390] sm:$0xff]
    %v159 = vld [vmem:[#allocation5 + $0x398] sm:$0xff]
    %v160 = vld [vmem:[#allocation5 + $0x3a0] sm:$0xff]
    %v161 = vld [vmem:[#allocation5 + $0x3a8] sm:$0xff]
    %v162 = vld [vmem:[#allocation5 + $0x3b0] sm:$0xff]
    %v163 = vld [vmem:[#allocation5 + $0x3b8] sm:$0xff]
    %v164 = vld [vmem:[#allocation5 + $0x3c0] sm:$0xff]
    %v165 = vld [vmem:[#allocation5 + $0x3c8] sm:$0xff]
    %v166 = vld [vmem:[#allocation5 + $0x3d0] sm:$0xff]
    %v167 = vld [vmem:[#allocation5 + $0x3d8] sm:$0xff]
    %v168 = vld [vmem:[#allocation5 + $0x3e0] sm:$0xff]
    %v169 = vld [vmem:[#allocation5 + $0x3e8] sm:$0xff]
    %v170 = vld [vmem:[#allocation5 + $0x3f0] sm:$0xff]
    %v171 = vld [vmem:[#allocation5 + $0x3f8] sm:$0xff]
    %v176 = vunpack.c.l.b16 %v40
    %v177 = vunpack.c.h.b16 %v40
    %v178 = vunpack.c.l.b16 %v41
    %v179 = vunpack.c.h.b16 %v41
    %v180 = vunpack.c.l.b16 %v42
    %v181 = vunpack.c.h.b16 %v42
    %v182 = vunpack.c.l.b16 %v43
    %v183 = vunpack.c.h.b16 %v43
    %v184 = vpack.c.b16 %v180, %v176
    %v185 = vpack.c.b16 %v181, %v177
    %v186 = vpack.c.b16 %v182, %v178
    %v187 = vpack.c.b16 %v183, %v179
    %v320 = vunpack.c.l.b16 %v44
    %v321 = vunpack.c.h.b16 %v44
    %v322 = vunpack.c.l.b16 %v45
    %v323 = vunpack.c.h.b16 %v45
    %v324 = vunpack.c.l.b16 %v46
    %v325 = vunpack.c.h.b16 %v46
    %v326 = vunpack.c.l.b16 %v47
    %v327 = vunpack.c.h.b16 %v47
    %v328 = vunpack.c.l.b16 %v48
    %v329 = vunpack.c.h.b16 %v48
    %v330 = vunpack.c.l.b16 %v49
    %v331 = vunpack.c.h.b16 %v49
    %v332 = vunpack.c.l.b16 %v50
    %v333 = vunpack.c.h.b16 %v50
    %v334 = vunpack.c.l.b16 %v51
    %v335 = vunpack.c.h.b16 %v51
    %v336 = vunpack.c.l.b16 %v52
    %v337 = vunpack.c.h.b16 %v52
    %v338 = vunpack.c.l.b16 %v53
    %v339 = vunpack.c.h.b16 %v53
    %v340 = vunpack.c.l.b16 %v54
    %v341 = vunpack.c.h.b16 %v54
    %v342 = vunpack.c.l.b16 %v55
    %v343 = vunpack.c.h.b16 %v55
    %v344 = vunpack.c.l.b16 %v56
    %v345 = vunpack.c.h.b16 %v56
    %v346 = vunpack.c.l.b16 %v57
    %v347 = vunpack.c.h.b16 %v57
    %v348 = vunpack.c.l.b16 %v58
    %v349 = vunpack.c.h.b16 %v58
    %v350 = vunpack.c.l.b16 %v59
    %v351 = vunpack.c.h.b16 %v59
    %v352 = vunpack.c.l.b16 %v60
    %v353 = vunpack.c.h.b16 %v60
    %v354 = vunpack.c.l.b16 %v61
    %v355 = vunpack.c.h.b16 %v61
    %v356 = vunpack.c.l.b16 %v62
    %v357 = vunpack.c.h.b16 %v62
    %v358 = vunpack.c.l.b16 %v63
    %v359 = vunpack.c.h.b16 %v63
    %v360 = vunpack.c.l.b16 %v64
    %v361 = vunpack.c.h.b16 %v64
    %v362 = vunpack.c.l.b16 %v65
    %v363 = vunpack.c.h.b16 %v65
    %v364 = vunpack.c.l.b16 %v66
    %v365 = vunpack.c.h.b16 %v66
    %v366 = vunpack.c.l.b16 %v67
    %v367 = vunpack.c.h.b16 %v67
    %v368 = vunpack.c.l.b16 %v68
    %v369 = vunpack.c.h.b16 %v68
    %v370 = vunpack.c.l.b16 %v69
    %v371 = vunpack.c.h.b16 %v69
    %v372 = vunpack.c.l.b16 %v70
    %v373 = vunpack.c.h.b16 %v70
    %v374 = vunpack.c.l.b16 %v71
    %v375 = vunpack.c.h.b16 %v71
    %v376 = vunpack.c.l.b16 %v72
    %v377 = vunpack.c.h.b16 %v72
    %v378 = vunpack.c.l.b16 %v73
    %v379 = vunpack.c.h.b16 %v73
    %v380 = vunpack.c.l.b16 %v74
    %v381 = vunpack.c.h.b16 %v74
    %v382 = vunpack.c.l.b16 %v75
    %v383 = vunpack.c.h.b16 %v75
    %v384 = vunpack.c.l.b16 %v76
    %v385 = vunpack.c.h.b16 %v76
    %v386 = vunpack.c.l.b16 %v77
    %v387 = vunpack.c.h.b16 %v77
    %v388 = vunpack.c.l.b16 %v78
    %v389 = vunpack.c.h.b16 %v78
    %v390 = vunpack.c.l.b16 %v79
    %v391 = vunpack.c.h.b16 %v79
    %v392 = vunpack.c.l.b16 %v80
    %v393 = vunpack.c.h.b16 %v80
    %v394 = vunpack.c.l.b16 %v81
    %v395 = vunpack.c.h.b16 %v81
    %v396 = vunpack.c.l.b16 %v82
    %v397 = vunpack.c.h.b16 %v82
    %v398 = vunpack.c.l.b16 %v83
    %v399 = vunpack.c.h.b16 %v83
    %v400 = vunpack.c.l.b16 %v84
    %v401 = vunpack.c.h.b16 %v84
    %v402 = vunpack.c.l.b16 %v85
    %v403 = vunpack.c.h.b16 %v85
    %v404 = vunpack.c.l.b16 %v86
    %v405 = vunpack.c.h.b16 %v86
    %v406 = vunpack.c.l.b16 %v87
    %v407 = vunpack.c.h.b16 %v87
    %v408 = vunpack.c.l.b16 %v88
    %v409 = vunpack.c.h.b16 %v88
    %v410 = vunpack.c.l.b16 %v89
    %v411 = vunpack.c.h.b16 %v89
    %v412 = vunpack.c.l.b16 %v90
    %v413 = vunpack.c.h.b16 %v90
    %v414 = vunpack.c.l.b16 %v91
    %v415 = vunpack.c.h.b16 %v91
    %v416 = vunpack.c.l.b16 %v92
    %v417 = vunpack.c.h.b16 %v92
    %v418 = vunpack.c.l.b16 %v93
    %v419 = vunpack.c.h.b16 %v93
    %v420 = vunpack.c.l.b16 %v94
    %v421 = vunpack.c.h.b16 %v94
    %v422 = vunpack.c.l.b16 %v95
    %v423 = vunpack.c.h.b16 %v95
    %v424 = vunpack.c.l.b16 %v96
    %v425 = vunpack.c.h.b16 %v96
    %v426 = vunpack.c.l.b16 %v97
    %v427 = vunpack.c.h.b16 %v97
    %v428 = vunpack.c.l.b16 %v98
    %v429 = vunpack.c.h.b16 %v98
    %v430 = vunpack.c.l.b16 %v99
    %v431 = vunpack.c.h.b16 %v99
    %v432 = vunpack.c.l.b16 %v100
    %v433 = vunpack.c.h.b16 %v100
    %v434 = vunpack.c.l.b16 %v101
    %v435 = vunpack.c.h.b16 %v101
    %v436 = vunpack.c.l.b16 %v102
    %v437 = vunpack.c.h.b16 %v102
    %v438 = vunpack.c.l.b16 %v103
    %v439 = vunpack.c.h.b16 %v103
    %v440 = vunpack.c.l.b16 %v104
    %v441 = vunpack.c.h.b16 %v104
    %v442 = vunpack.c.l.b16 %v105
    %v443 = vunpack.c.h.b16 %v105
    %v444 = vunpack.c.l.b16 %v106
    %v445 = vunpack.c.h.b16 %v106
    %v446 = vunpack.c.l.b16 %v107
    %v447 = vunpack.c.h.b16 %v107
    %v448 = vunpack.c.l.b16 %v108
    %v449 = vunpack.c.h.b16 %v108
    %v450 = vunpack.c.l.b16 %v109
    %v451 = vunpack.c.h.b16 %v109
    %v452 = vunpack.c.l.b16 %v110
    %v453 = vunpack.c.h.b16 %v110
    %v454 = vunpack.c.l.b16 %v111
    %v455 = vunpack.c.h.b16 %v111
    %v456 = vunpack.c.l.b16 %v112
    %v457 = vunpack.c.h.b16 %v112
    %v458 = vunpack.c.l.b16 %v113
    %v459 = vunpack.c.h.b16 %v113
    %v460 = vunpack.c.l.b16 %v114
    %v461 = vunpack.c.h.b16 %v114
    %v462 = vunpack.c.l.b16 %v115
    %v463 = vunpack.c.h.b16 %v115
    %v464 = vunpack.c.l.b16 %v116
    %v465 = vunpack.c.h.b16 %v116
    %v466 = vunpack.c.l.b16 %v117
    %v467 = vunpack.c.h.b16 %v117
    %v468 = vunpack.c.l.b16 %v118
    %v469 = vunpack.c.h.b16 %v118
    %v470 = vunpack.c.l.b16 %v119
    %v471 = vunpack.c.h.b16 %v119
    %v472 = vunpack.c.l.b16 %v120
    %v473 = vunpack.c.h.b16 %v120
    %v474 = vunpack.c.l.b16 %v121
    %v475 = vunpack.c.h.b16 %v121
    %v476 = vunpack.c.l.b16 %v122
    %v477 = vunpack.c.h.b16 %v122
    %v478 = vunpack.c.l.b16 %v123
    %v479 = vunpack.c.h.b16 %v123
    %v480 = vunpack.c.l.b16 %v124
    %v481 = vunpack.c.h.b16 %v124
    %v482 = vunpack.c.l.b16 %v125
    %v483 = vunpack.c.h.b16 %v125
    %v484 = vunpack.c.l.b16 %v126
    %v485 = vunpack.c.h.b16 %v126
    %v486 = vunpack.c.l.b16 %v127
    %v487 = vunpack.c.h.b16 %v127
    %v488 = vunpack.c.l.b16 %v128
    %v489 = vunpack.c.h.b16 %v128
    %v490 = vunpack.c.l.b16 %v129
    %v491 = vunpack.c.h.b16 %v129
    %v492 = vunpack.c.l.b16 %v130
    %v493 = vunpack.c.h.b16 %v130
    %v494 = vunpack.c.l.b16 %v131
    %v495 = vunpack.c.h.b16 %v131
    %v496 = vunpack.c.l.b16 %v132
    %v497 = vunpack.c.h.b16 %v132
    %v498 = vunpack.c.l.b16 %v133
    %v499 = vunpack.c.h.b16 %v133
    %v500 = vunpack.c.l.b16 %v134
    %v501 = vunpack.c.h.b16 %v134
    %v502 = vunpack.c.l.b16 %v135
    %v503 = vunpack.c.h.b16 %v135
    %v504 = vunpack.c.l.b16 %v136
    %v505 = vunpack.c.h.b16 %v136
    %v506 = vunpack.c.l.b16 %v137
    %v507 = vunpack.c.h.b16 %v137
    %v508 = vunpack.c.l.b16 %v138
    %v509 = vunpack.c.h.b16 %v138
    %v510 = vunpack.c.l.b16 %v139
    %v511 = vunpack.c.h.b16 %v139
    %v512 = vunpack.c.l.b16 %v140
    %v513 = vunpack.c.h.b16 %v140
    %v514 = vunpack.c.l.b16 %v141
    %v515 = vunpack.c.h.b16 %v141
    %v516 = vunpack.c.l.b16 %v142
    %v517 = vunpack.c.h.b16 %v142
    %v518 = vunpack.c.l.b16 %v143
    %v519 = vunpack.c.h.b16 %v143
    %v520 = vunpack.c.l.b16 %v144
    %v521 = vunpack.c.h.b16 %v144
    %v522 = vunpack.c.l.b16 %v145
    %v523 = vunpack.c.h.b16 %v145
    %v524 = vunpack.c.l.b16 %v146
    %v525 = vunpack.c.h.b16 %v146
    %v526 = vunpack.c.l.b16 %v147
    %v527 = vunpack.c.h.b16 %v147
    %v528 = vunpack.c.l.b16 %v148
    %v529 = vunpack.c.h.b16 %v148
    %v530 = vunpack.c.l.b16 %v149
    %v531 = vunpack.c.h.b16 %v149
    %v532 = vunpack.c.l.b16 %v150
    %v533 = vunpack.c.h.b16 %v150
    %v534 = vunpack.c.l.b16 %v151
    %v535 = vunpack.c.h.b16 %v151
    %v536 = vunpack.c.l.b16 %v152
    %v537 = vunpack.c.h.b16 %v152
    %v538 = vunpack.c.l.b16 %v153
    %v539 = vunpack.c.h.b16 %v153
    %v540 = vunpack.c.l.b16 %v154
    %v541 = vunpack.c.h.b16 %v154
    %v542 = vunpack.c.l.b16 %v155
    %v543 = vunpack.c.h.b16 %v155
    %v544 = vunpack.c.l.b16 %v156
    %v545 = vunpack.c.h.b16 %v156
    %v546 = vunpack.c.l.b16 %v157
    %v547 = vunpack.c.h.b16 %v157
    %v548 = vunpack.c.l.b16 %v158
    %v549 = vunpack.c.h.b16 %v158
    %v550 = vunpack.c.l.b16 %v159
    %v551 = vunpack.c.h.b16 %v159
    %v552 = vunpack.c.l.b16 %v160
    %v553 = vunpack.c.h.b16 %v160
    %v554 = vunpack.c.l.b16 %v161
    %v555 = vunpack.c.h.b16 %v161
    %v556 = vunpack.c.l.b16 %v162
    %v557 = vunpack.c.h.b16 %v162
    %v558 = vunpack.c.l.b16 %v163
    %v559 = vunpack.c.h.b16 %v163
    %v560 = vunpack.c.l.b16 %v164
    %v561 = vunpack.c.h.b16 %v164
    %v562 = vunpack.c.l.b16 %v165
    %v563 = vunpack.c.h.b16 %v165
    %v564 = vunpack.c.l.b16 %v166
    %v565 = vunpack.c.h.b16 %v166
    %v566 = vunpack.c.l.b16 %v167
    %v567 = vunpack.c.h.b16 %v167
    %v568 = vunpack.c.l.b16 %v168
    %v569 = vunpack.c.h.b16 %v168
    %v570 = vunpack.c.l.b16 %v169
    %v571 = vunpack.c.h.b16 %v169
    %v572 = vunpack.c.l.b16 %v170
    %v573 = vunpack.c.h.b16 %v170
    %v574 = vunpack.c.l.b16 %v171
    %v575 = vunpack.c.h.b16 %v171
    %v576 = vpack.c.b16 %v324, %v320
    %v577 = vpack.c.b16 %v325, %v321
    %v578 = vpack.c.b16 %v326, %v322
    %v579 = vpack.c.b16 %v327, %v323
    %v580 = vpack.c.b16 %v332, %v328
    %v581 = vpack.c.b16 %v333, %v329
    %v582 = vpack.c.b16 %v334, %v330
    %v583 = vpack.c.b16 %v335, %v331
    %v584 = vpack.c.b16 %v340, %v336
    %v585 = vpack.c.b16 %v341, %v337
    %v586 = vpack.c.b16 %v342, %v338
    %v587 = vpack.c.b16 %v343, %v339
    %v588 = vpack.c.b16 %v348, %v344
    %v589 = vpack.c.b16 %v349, %v345
    %v590 = vpack.c.b16 %v350, %v346
    %v591 = vpack.c.b16 %v351, %v347
    %v592 = vpack.c.b16 %v356, %v352
    %v593 = vpack.c.b16 %v357, %v353
    %v594 = vpack.c.b16 %v358, %v354
    %v595 = vpack.c.b16 %v359, %v355
    %v596 = vpack.c.b16 %v364, %v360
    %v597 = vpack.c.b16 %v365, %v361
    %v598 = vpack.c.b16 %v366, %v362
    %v599 = vpack.c.b16 %v367, %v363
    %v600 = vpack.c.b16 %v372, %v368
    %v601 = vpack.c.b16 %v373, %v369
    %v602 = vpack.c.b16 %v374, %v370
    %v603 = vpack.c.b16 %v375, %v371
    %v604 = vpack.c.b16 %v380, %v376
    %v605 = vpack.c.b16 %v381, %v377
    %v606 = vpack.c.b16 %v382, %v378
    %v607 = vpack.c.b16 %v383, %v379
    %v608 = vpack.c.b16 %v388, %v384
    %v609 = vpack.c.b16 %v389, %v385
    %v610 = vpack.c.b16 %v390, %v386
    %v611 = vpack.c.b16 %v391, %v387
    %v612 = vpack.c.b16 %v396, %v392
    %v613 = vpack.c.b16 %v397, %v393
    %v614 = vpack.c.b16 %v398, %v394
    %v615 = vpack.c.b16 %v399, %v395
    %v616 = vpack.c.b16 %v404, %v400
    %v617 = vpack.c.b16 %v405, %v401
    %v618 = vpack.c.b16 %v406, %v402
    %v619 = vpack.c.b16 %v407, %v403
    %v620 = vpack.c.b16 %v412, %v408
    %v621 = vpack.c.b16 %v413, %v409
    %v622 = vpack.c.b16 %v414, %v410
    %v623 = vpack.c.b16 %v415, %v411
    %v624 = vpack.c.b16 %v420, %v416
    %v625 = vpack.c.b16 %v421, %v417
    %v626 = vpack.c.b16 %v422, %v418
    %v627 = vpack.c.b16 %v423, %v419
    %v628 = vpack.c.b16 %v428, %v424
    %v629 = vpack.c.b16 %v429, %v425
    %v630 = vpack.c.b16 %v430, %v426
    %v631 = vpack.c.b16 %v431, %v427
    %v632 = vpack.c.b16 %v436, %v432
    %v633 = vpack.c.b16 %v437, %v433
    %v634 = vpack.c.b16 %v438, %v434
    %v635 = vpack.c.b16 %v439, %v435
    %v636 = vpack.c.b16 %v444, %v440
    %v637 = vpack.c.b16 %v445, %v441
    %v638 = vpack.c.b16 %v446, %v442
    %v639 = vpack.c.b16 %v447, %v443
    %v640 = vpack.c.b16 %v452, %v448
    %v641 = vpack.c.b16 %v453, %v449
    %v642 = vpack.c.b16 %v454, %v450
    %v643 = vpack.c.b16 %v455, %v451
    %v644 = vpack.c.b16 %v460, %v456
    %v645 = vpack.c.b16 %v461, %v457
    %v646 = vpack.c.b16 %v462, %v458
    %v647 = vpack.c.b16 %v463, %v459
    %v648 = vpack.c.b16 %v468, %v464
    %v649 = vpack.c.b16 %v469, %v465
    %v650 = vpack.c.b16 %v470, %v466
    %v651 = vpack.c.b16 %v471, %v467
    %v652 = vpack.c.b16 %v476, %v472
    %v653 = vpack.c.b16 %v477, %v473
    %v654 = vpack.c.b16 %v478, %v474
    %v655 = vpack.c.b16 %v479, %v475
    %v656 = vpack.c.b16 %v484, %v480
    %v657 = vpack.c.b16 %v485, %v481
    %v658 = vpack.c.b16 %v486, %v482
    %v659 = vpack.c.b16 %v487, %v483
    %v660 = vpack.c.b16 %v492, %v488
    %v661 = vpack.c.b16 %v493, %v489
    %v662 = vpack.c.b16 %v494, %v490
    %v663 = vpack.c.b16 %v495, %v491
    %v664 = vpack.c.b16 %v500, %v496
    %v665 = vpack.c.b16 %v501, %v497
    %v666 = vpack.c.b16 %v502, %v498
    %v667 = vpack.c.b16 %v503, %v499
    %v668 = vpack.c.b16 %v508, %v504
    %v669 = vpack.c.b16 %v509, %v505
    %v670 = vpack.c.b16 %v510, %v506
    %v671 = vpack.c.b16 %v511, %v507
    %v672 = vpack.c.b16 %v516, %v512
    %v673 = vpack.c.b16 %v517, %v513
    %v674 = vpack.c.b16 %v518, %v514
    %v675 = vpack.c.b16 %v519, %v515
    %v676 = vpack.c.b16 %v524, %v520
    %v677 = vpack.c.b16 %v525, %v521
    %v678 = vpack.c.b16 %v526, %v522
    %v679 = vpack.c.b16 %v527, %v523
    %v680 = vpack.c.b16 %v532, %v528
    %v681 = vpack.c.b16 %v533, %v529
    %v682 = vpack.c.b16 %v534, %v530
    %v683 = vpack.c.b16 %v535, %v531
    %v684 = vpack.c.b16 %v540, %v536
    %v685 = vpack.c.b16 %v541, %v537
    %v686 = vpack.c.b16 %v542, %v538
    %v687 = vpack.c.b16 %v543, %v539
    %v688 = vpack.c.b16 %v548, %v544
    %v689 = vpack.c.b16 %v549, %v545
    %v690 = vpack.c.b16 %v550, %v546
    %v691 = vpack.c.b16 %v551, %v547
    %v692 = vpack.c.b16 %v556, %v552
    %v693 = vpack.c.b16 %v557, %v553
    %v694 = vpack.c.b16 %v558, %v554
    %v695 = vpack.c.b16 %v559, %v555
    %v696 = vpack.c.b16 %v564, %v560
    %v697 = vpack.c.b16 %v565, %v561
    %v698 = vpack.c.b16 %v566, %v562
    %v699 = vpack.c.b16 %v567, %v563
    %v700 = vpack.c.b16 %v572, %v568
    %v701 = vpack.c.b16 %v573, %v569
    %v702 = vpack.c.b16 %v574, %v570
    %v703 = vpack.c.b16 %v575, %v571
    %832 = vmatprep.subr.bf16.mxu0 %v577
    %833 = vmatpush1.bf16.msra.mxu0 %v576
    %834 = vmatprep.subr.bf16.mxu0 %v581
    %835 = vmatpush1.bf16.msra.mxu0 %v580
    %836 = vmatprep.subr.bf16.mxu0 %v585
    %837 = vmatpush1.bf16.msra.mxu0 %v584
    %838 = vmatprep.subr.bf16.mxu0 %v589
    %839 = vmatpush1.bf16.msra.mxu0 %v588
    %840 = vmatprep.subr.bf16.mxu0 %v593
    %841 = vmatpush1.bf16.msra.mxu0 %v592
    %842 = vmatprep.subr.bf16.mxu0 %v597
    %843 = vmatpush1.bf16.msra.mxu0 %v596
    %844 = vmatprep.subr.bf16.mxu0 %v601
    %845 = vmatpush1.bf16.msra.mxu0 %v600
    %846 = vmatprep.subr.bf16.mxu0 %v605
    %847 = vmatpush1.bf16.msra.mxu0 %v604
    %848 = vmatprep.subr.bf16.mxu0 %v609
    %849 = vmatpush1.bf16.msra.mxu0 %v608
    %850 = vmatprep.subr.bf16.mxu0 %v613
    %851 = vmatpush1.bf16.msra.mxu0 %v612
    %852 = vmatprep.subr.bf16.mxu0 %v617
    %853 = vmatpush1.bf16.msra.mxu0 %v616
    %854 = vmatprep.subr.bf16.mxu0 %v621
    %855 = vmatpush1.bf16.msra.mxu0 %v620
    %856 = vmatprep.subr.bf16.mxu0 %v625
    %857 = vmatpush1.bf16.msra.mxu0 %v624
    %858 = vmatprep.subr.bf16.mxu0 %v629
    %859 = vmatpush1.bf16.msra.mxu0 %v628
    %860 = vmatprep.subr.bf16.mxu0 %v633
    %861 = vmatpush1.bf16.msra.mxu0 %v632
    %862 = vmatprep.subr.bf16.mxu0 %v637
    %863 = vmatpush1.bf16.msra.mxu0 %v636
    %864 = vmatprep.mubr.bf16.mxu0 %v185
    %865 = vmatmul.mubr.bf16.gmra.mrb[0].mxu0 %v184
    %v866 = vpop.f32.mrb[0].mxu0
    %v867 = vadd.f32 0.0, %v866
    %v868 = vpop.f32.mrb[0].mxu0
    %v869 = vadd.f32 0.0, %v868
    %v870 = vpop.f32.mrb[0].mxu0
    %v871 = vadd.f32 0.0, %v870
    %v872 = vpop.f32.mrb[0].mxu0
    %v873 = vadd.f32 0.0, %v872
    %874 = vdwg.mxu0
    %875 = vmatprep.subr.bf16.mxu0 %v641
    %876 = vmatpush1.bf16.msra.mxu0 %v640
    %877 = vmatprep.subr.bf16.mxu0 %v645
    %878 = vmatpush1.bf16.msra.mxu0 %v644
    %879 = vmatprep.subr.bf16.mxu0 %v649
    %880 = vmatpush1.bf16.msra.mxu0 %v648
    %881 = vmatprep.subr.bf16.mxu0 %v653
    %882 = vmatpush1.bf16.msra.mxu0 %v652
    %883 = vmatprep.subr.bf16.mxu0 %v657
    %884 = vmatpush1.bf16.msra.mxu0 %v656
    %885 = vmatprep.subr.bf16.mxu0 %v661
    %886 = vmatpush1.bf16.msra.mxu0 %v660
    %887 = vmatprep.subr.bf16.mxu0 %v665
    %888 = vmatpush1.bf16.msra.mxu0 %v664
    %889 = vmatprep.subr.bf16.mxu0 %v669
    %890 = vmatpush1.bf16.msra.mxu0 %v668
    %891 = vmatprep.subr.bf16.mxu0 %v673
    %892 = vmatpush1.bf16.msra.mxu0 %v672
    %893 = vmatprep.subr.bf16.mxu0 %v677
    %894 = vmatpush1.bf16.msra.mxu0 %v676
    %895 = vmatprep.subr.bf16.mxu0 %v681
    %896 = vmatpush1.bf16.msra.mxu0 %v680
    %897 = vmatprep.subr.bf16.mxu0 %v685
    %898 = vmatpush1.bf16.msra.mxu0 %v684
    %899 = vmatprep.subr.bf16.mxu0 %v689
    %900 = vmatpush1.bf16.msra.mxu0 %v688
    %901 = vmatprep.subr.bf16.mxu0 %v693
    %902 = vmatpush1.bf16.msra.mxu0 %v692
    %903 = vmatprep.subr.bf16.mxu0 %v697
    %904 = vmatpush1.bf16.msra.mxu0 %v696
    %905 = vmatprep.subr.bf16.mxu0 %v701
    %906 = vmatpush1.bf16.msra.mxu0 %v700
    %907 = vmatprep.mubr.bf16.mxu0 %v187
    %908 = vmatmul.mubr.bf16.gmra.mrb[0].mxu0 %v186
    %v909 = vpop.f32.mrb[0].mxu0
    %v910 = vadd.f32 %v867, %v909
    %v911 = vpop.f32.mrb[0].mxu0
    %v912 = vadd.f32 %v869, %v911
    %v913 = vpop.f32.mrb[0].mxu0
    %v914 = vadd.f32 %v871, %v913
    %v915 = vpop.f32.mrb[0].mxu0
    %v916 = vadd.f32 %v873, %v915
    %917 = vdwg.mxu0
    %918 = vmatprep.subr.bf16.mxu0 %v579
    %919 = vmatpush1.bf16.msra.mxu0 %v578
    %920 = vmatprep.subr.bf16.mxu0 %v583
    %921 = vmatpush1.bf16.msra.mxu0 %v582
    %922 = vmatprep.subr.bf16.mxu0 %v587
    %923 = vmatpush1.bf16.msra.mxu0 %v586
    %924 = vmatprep.subr.bf16.mxu0 %v591
    %925 = vmatpush1.bf16.msra.mxu0 %v590
    %926 = vmatprep.subr.bf16.mxu0 %v595
    %927 = vmatpush1.bf16.msra.mxu0 %v594
    %928 = vmatprep.subr.bf16.mxu0 %v599
    %929 = vmatpush1.bf16.msra.mxu0 %v598
    %930 = vmatprep.subr.bf16.mxu0 %v603
    %931 = vmatpush1.bf16.msra.mxu0 %v602
    %932 = vmatprep.subr.bf16.mxu0 %v607
    %933 = vmatpush1.bf16.msra.mxu0 %v606
    %934 = vmatprep.subr.bf16.mxu0 %v611
    %935 = vmatpush1.bf16.msra.mxu0 %v610
    %936 = vmatprep.subr.bf16.mxu0 %v615
    %937 = vmatpush1.bf16.msra.mxu0 %v614
    %938 = vmatprep.subr.bf16.mxu0 %v619
    %939 = vmatpush1.bf16.msra.mxu0 %v618
    %940 = vmatprep.subr.bf16.mxu0 %v623
    %941 = vmatpush1.bf16.msra.mxu0 %v622
    %942 = vmatprep.subr.bf16.mxu0 %v627
    %943 = vmatpush1.bf16.msra.mxu0 %v626
    %944 = vmatprep.subr.bf16.mxu0 %v631
    %945 = vmatpush1.bf16.msra.mxu0 %v630
    %946 = vmatprep.subr.bf16.mxu0 %v635
    %947 = vmatpush1.bf16.msra.mxu0 %v634
    %948 = vmatprep.subr.bf16.mxu0 %v639
    %949 = vmatpush1.bf16.msra.mxu0 %v638
    %950 = vmatprep.mubr.bf16.mxu0 %v185
    %951 = vmatmul.mubr.bf16.gmra.mrb[0].mxu0 %v184
    %v952 = vpop.f32.mrb[0].mxu0
    %v953 = vadd.f32 0.0, %v952
    %v954 = vpop.f32.mrb[0].mxu0
    %v955 = vadd.f32 0.0, %v954
    %v956 = vpop.f32.mrb[0].mxu0
    %v957 = vadd.f32 0.0, %v956
    %v958 = vpop.f32.mrb[0].mxu0
    %v959 = vadd.f32 0.0, %v958
    %960 = vdwg.mxu0
    %961 = vmatprep.subr.bf16.mxu0 %v643
    %962 = vmatpush1.bf16.msra.mxu0 %v642
    %963 = vmatprep.subr.bf16.mxu0 %v647
    %964 = vmatpush1.bf16.msra.mxu0 %v646
    %965 = vmatprep.subr.bf16.mxu0 %v651
    %966 = vmatpush1.bf16.msra.mxu0 %v650
    %967 = vmatprep.subr.bf16.mxu0 %v655
    %968 = vmatpush1.bf16.msra.mxu0 %v654
    %969 = vmatprep.subr.bf16.mxu0 %v659
    %970 = vmatpush1.bf16.msra.mxu0 %v658
    %971 = vmatprep.subr.bf16.mxu0 %v663
    %972 = vmatpush1.bf16.msra.mxu0 %v662
    %973 = vmatprep.subr.bf16.mxu0 %v667
    %974 = vmatpush1.bf16.msra.mxu0 %v666
    %975 = vmatprep.subr.bf16.mxu0 %v671
    %976 = vmatpush1.bf16.msra.mxu0 %v670
    %977 = vmatprep.subr.bf16.mxu0 %v675
    %978 = vmatpush1.bf16.msra.mxu0 %v674
    %979 = vmatprep.subr.bf16.mxu0 %v679
    %980 = vmatpush1.bf16.msra.mxu0 %v678
    %981 = vmatprep.subr.bf16.mxu0 %v683
    %982 = vmatpush1.bf16.msra.mxu0 %v682
    %983 = vmatprep.subr.bf16.mxu0 %v687
    %984 = vmatpush1.bf16.msra.mxu0 %v686
    %985 = vmatprep.subr.bf16.mxu0 %v691
    %986 = vmatpush1.bf16.msra.mxu0 %v690
    %987 = vmatprep.subr.bf16.mxu0 %v695
    %988 = vmatpush1.bf16.msra.mxu0 %v694
    %989 = vmatprep.subr.bf16.mxu0 %v699
    %990 = vmatpush1.bf16.msra.mxu0 %v698
    %991 = vmatprep.subr.bf16.mxu0 %v703
    %992 = vmatpush1.bf16.msra.mxu0 %v702
    %993 = vmatprep.mubr.bf16.mxu0 %v187
    %994 = vmatmul.mubr.bf16.gmra.mrb[0].mxu0 %v186
    %v995 = vpop.f32.mrb[0].mxu0
    %v996 = vadd.f32 %v953, %v995
    %v997 = vpop.f32.mrb[0].mxu0
    %v998 = vadd.f32 %v955, %v997
    %v999 = vpop.f32.mrb[0].mxu0
    %v1000 = vadd.f32 %v957, %v999
    %v1001 = vpop.f32.mrb[0].mxu0
    %v1002 = vadd.f32 %v959, %v1001
    %1003 = vdwg.mxu0
    %v1004 = vunpack.c.l.bf16 %v40
    %v1005 = vunpack.c.h.bf16 %v40
    %v1006 = vunpack.c.l.bf16 %v41
    %v1007 = vunpack.c.h.bf16 %v41
    %v1008 = vunpack.c.l.bf16 %v42
    %v1009 = vunpack.c.h.bf16 %v42
    %v1010 = vunpack.c.l.bf16 %v43
    %v1011 = vunpack.c.h.bf16 %v43
    %v1012 = vmul.f32 %v910, %v910
    %v1013 = vmul.f32 %v912, %v912
    %v1014 = vmul.f32 %v996, %v996
    %v1015 = vmul.f32 %v998, %v998
    %v1016 = vmul.f32 %v914, %v914
    %v1017 = vmul.f32 %v916, %v916
    %v1018 = vmul.f32 %v1000, %v1000
    %v1019 = vmul.f32 %v1002, %v1002
    %v1020 = vadd.f32 %v1012, %v1016
    %v1021 = vadd.f32 %v1013, %v1017
    %v1022 = vadd.f32 %v1014, %v1018
    %v1023 = vadd.f32 %v1015, %v1019
    %v1024 = vadd.f32 %v1020, %v1021
    %v1025 = vadd.f32 %v1024, %v1022
    %v1026 = vadd.f32 %v1025, %v1023
    %v1027 = vmul.f32 %v1026, 0.1
    %v1028 = vmul.f32 %v1004, %v1004
    %v1029 = vmul.f32 %v1005, %v1005
    %v1030 = vmul.f32 %v1006, %v1006
    %v1031 = vmul.f32 %v1007, %v1007
    %v1032 = vmul.f32 %v1008, %v1008
    %v1033 = vmul.f32 %v1009, %v1009
    %v1034 = vmul.f32 %v1010, %v1010
    %v1035 = vmul.f32 %v1011, %v1011
    %v1036 = vadd.f32 %v1028, %v1032
    %v1037 = vadd.f32 %v1029, %v1033
    %v1038 = vadd.f32 %v1030, %v1034
    %v1039 = vadd.f32 %v1031, %v1035
    %v1040 = vadd.f32 %v1036, %v1037
    %v1041 = vadd.f32 %v1040, %v1038
    %v1042 = vadd.f32 %v1041, %v1039
    %v1043 = vadd.f32 %v1027, %v1042
    %1044 = vst [vmem:[#allocation7] sm:$0xff] %v1043
    // Predicated region
    $region18: #{tpu_custom_call.1} parent=1 // pred_check
      _
    $region19: #{tpu_custom_call.1} parent=1 // pred_check_branch
      %1046 = sbr.rel (0) target = $region21
    $region20: #{tpu_custom_call.1} parent=1 // pred_region
      %s1048 = ssub.s32 128, 128
      %1049 = vsyncadd [#allocation4], %s1048
      %s1051 = sshll.u32 [#allocation7], 4
      %s1052 = int_to_ptr.vmem [resolvable:$true] %s1051
      %1054 = dma.vmem_to_hbm [thread:$0]  %s1052, 128, %s2, [#allocation4]
    $region21: #{tpu_custom_call.1} parent=1 // pred_fallthru
      _
    // Predicated region
    $region22: #{tpu_custom_call.1} parent=1 // pred_check
      _
    $region23: #{tpu_custom_call.1} parent=1 // pred_check_branch
      %1056 = sbr.rel (0) target = $region25
    $region24: #{tpu_custom_call.1} parent=1 // pred_region
      %1057 = dma.done [#allocation4], 128
    $region25: #{tpu_custom_call.1} parent=1 // pred_fallthru
      _
    %1058 = vsyncpa [#allocation3], 1
    %1059 = vsyncpa [#allocation6], 1
    %1060 = vsyncpa [#allocation4], 1

</llo_original>
